<compile_context>
chip_gen: v5e
topology: v5e:2x2
jax: 0.10.0
libtpu: 0.0.40
codegen_flags: <defaults>
</compile_context>

<pallas_src>
import jax
import jax.numpy as jnp
from jax import lax
from jax.experimental import pallas as pl
from jax.experimental.pallas import tpu as pltpu

_SLAB = 128  # width of each per-slab MXU cumsum


def _lovasz_kernel(err_ref, gt_ref, gts_ref, pos_ref, out_ref,
                   tri_ref, acc_ref, carry_ref, prevjac_ref):
    # err_ref : (TN, TP) f32   per-row hinge errors, sorted descending (chunk j)
    # gt_ref  : (TN, TP) bf16  labels permuted by the same sort (chunk j)
    # gts_ref : (TN, 1)  f32   per-row total foreground count (whole row)
    # pos_ref : (1, TP)  f32   global 1-based positions for chunk j (precomputed)
    # out_ref : (TN, 1)  f32   per-row loss, written once at the last chunk
    # tri_ref     : (128,128) bf16 VMEM  upper-triangular ones (built at j == 0)
    # acc_ref     : (TN, 1) f32 VMEM     per-row loss accumulator
    # carry_ref   : (TN, 1) f32 VMEM     running cumsum of gt up to current position
    # prevjac_ref : (TN, 1) f32 VMEM     jaccard value at the previous position
    j = pl.program_id(1)
    tn, tp = err_ref.shape          # static Python ints
    n_slabs = tp // _SLAB

    @pl.when(j == 0)
    def _():
        acc_ref[...] = jnp.zeros_like(acc_ref)
        carry_ref[...] = jnp.zeros_like(carry_ref)
        prevjac_ref[...] = jnp.zeros_like(prevjac_ref)
        r = lax.broadcasted_iota(jnp.int32, (_SLAB, _SLAB), 0)
        c = lax.broadcasted_iota(jnp.int32, (_SLAB, _SLAB), 1)
        tri_ref[...] = (r <= c).astype(jnp.bfloat16)

    gts = gts_ref[...]                                         # (TN, 1)
    tri = tri_ref[...]                                         # (128, 128) bf16
    first_col = lax.broadcasted_iota(jnp.int32, (1, _SLAB), 1) == 0

    loss = acc_ref[...]
    carry = carry_ref[...]
    prevjac = prevjac_ref[...]

    # 128-wide slabs: small exact MXU matmuls ({0,1} operands, f32 accumulation)
    # give the within-slab inclusive cumsum; the running cumsum and the jaccard
    # boundary value are threaded through the loop (and across chunks via VMEM).
    for s in range(n_slabs):
        sl = slice(s * _SLAB, (s + 1) * _SLAB)
        g = gt_ref[:, sl]                                      # (TN, 128) bf16
        err = err_ref[:, sl]                                   # (TN, 128) f32
        pos = pos_ref[:, sl]                                   # (1, 128)  f32

        cum = carry + jnp.dot(g, tri, preferred_element_type=jnp.float32)
        union = gts + pos - cum                                # >= 1 always
        # jaccard = 1 - (gts - cum) / union == pos / union  (exact algebra).
        jaccard = pos / union

        # grad[k] = jaccard[k] - jaccard[k-1]; the boundary value (last jaccard
        # of the previous slab/chunk, 0 for the very first position) is carried.
        prev = pltpu.roll(jaccard, shift=1, axis=1)
        prev = jnp.where(first_col, prevjac, prev)
        grad = jaccard - prev

        loss = loss + jnp.sum(jnp.maximum(err, 0.0) * grad, axis=1, keepdims=True)
        carry = cum[:, _SLAB - 1:_SLAB]
        prevjac = jaccard[:, _SLAB - 1:_SLAB]

    acc_ref[...] = loss
    carry_ref[...] = carry
    prevjac_ref[...] = prevjac

    @pl.when(j == pl.num_programs(1) - 1)
    def _():
        out_ref[...] = loss


def lovasz_loss(outputs, targets):
    """Pallas implementation of LovaszLoss(per_image=True, per_class=True).forward."""
    B, C, H, W = outputs.shape
    P = H * W
    N = B * C

    # Mean over images then over classes == mean over all N = B*C rows (equal
    # counts, ignore=None), so no NCHW -> CNHW transpose is needed.
    logits = outputs.reshape(N, P).astype(jnp.float32)
    labels = targets.reshape(N, P).astype(jnp.float32)

    signs = 2.0 * labels - 1.0
    errors = 1.0 - logits * signs
    gts = jnp.sum(labels, axis=-1, keepdims=True)              # (N, 1)

    # Descending co-sort of (errors, labels) per row: keyed lax.sort carries the
    # labels through the sort network (no argsort + gathers).
    # TODO(synk): the row-wise sort itself has no clean Pallas/Mosaic primitive;
    # it stays in plain JAX glue.
    neg_sorted, gt_sorted = lax.sort((-errors, labels), dimension=-1, num_keys=1)
    errors_sorted = -neg_sorted

    # ---- tiling --------------------------------------------------------------
    n8 = 8 * pl.cdiv(N, 8)
    if n8 >= 16:
        # Large row tiles (amortize per-step overhead) but keep >= 2 row tiles
        # so the "parallel" axis can shard across v7x's two TensorCores.
        TN = min(1024, max(8, (n8 // 2) // 8 * 8))
    else:
        TN = n8
    N_pad = TN * pl.cdiv(N, TN)

    p128 = 128 * pl.cdiv(P, 128)
    TP = min(p128, 512)                 # P chunk (multiple of 128, i.e. of _SLAB)
    P_pad = TP * pl.cdiv(P, TP)

    pad_n, pad_p = N_pad - N, P_pad - P
    if pad_n or pad_p:
        # Padded columns are appended AFTER the sorted data with err = -1, gt = 0:
        # relu(err) == 0 kills their contribution (NOT because -1 is below the
        # sorted tail -- real sorted errors can be < -1), and gt = 0 means they
        # cannot perturb earlier positions (cumsum flows forward only).  Padded
        # rows (gts == 0, err <= 0) contribute exactly 0.
        errors_sorted = jnp.pad(errors_sorted, ((0, pad_n), (0, pad_p)),
                                constant_values=-1.0)
        gt_sorted = jnp.pad(gt_sorted, ((0, pad_n), (0, pad_p)))
        gts = jnp.pad(gts, ((0, pad_n), (0, 0)))

    gt_sorted_bf = gt_sorted.astype(jnp.bfloat16)               # exact: {0, 1}
    # Precomputed global 1-based position row (exact in f32 up to 2^24 pixels).
    pos_row = jnp.arange(1, P_pad + 1, dtype=jnp.float32).reshape(1, P_pad)

    per_row = pl.pallas_call(
        _lovasz_kernel,
        out_shape=jax.ShapeDtypeStruct((N_pad, 1), jnp.float32),
        grid_spec=pltpu.PrefetchScalarGridSpec(
            num_scalar_prefetch=0,
            grid=(N_pad // TN, P_pad // TP),
            in_specs=[
                pl.BlockSpec((TN, TP), lambda i, j: (i, j)),    # errors_sorted
                pl.BlockSpec((TN, TP), lambda i, j: (i, j)),    # gt_sorted (bf16)
                pl.BlockSpec((TN, 1), lambda i, j: (i, 0)),     # gts
                pl.BlockSpec((1, TP), lambda i, j: (0, j)),     # position row
            ],
            out_specs=pl.BlockSpec((TN, 1), lambda i, j: (i, 0)),
            scratch_shapes=[
                pltpu.VMEM((_SLAB, _SLAB), jnp.bfloat16),       # tri (built in-kernel)
                pltpu.VMEM((TN, 1), jnp.float32),               # loss accumulator
                pltpu.VMEM((TN, 1), jnp.float32),               # cumsum carry
                pltpu.VMEM((TN, 1), jnp.float32),               # jaccard carry
            ],
        ),
        compiler_params=pltpu.CompilerParams(
            dimension_semantics=("parallel", "arbitrary"),
            vmem_limit_bytes=32 * 1024 * 1024),
    )(errors_sorted, gt_sorted_bf, gts, pos_row)

    return jnp.sum(per_row[:N, 0]) / float(N)


def _lovasz_loss_ref(outputs, targets):
    """Pure-JAX mirror of the PyTorch reference (for a sanity check)."""
    B, C, H, W = outputs.shape
    class_losses = []
    for c in range(C):
        img_losses = []
        for b in range(B):
            lg = outputs[b, c].reshape(-1).astype(jnp.float32)
            lb = targets[b, c].reshape(-1).astype(jnp.float32)
            signs = 2.0 * lb - 1.0
            errors = 1.0 - lg * signs
            order = jnp.argsort(-errors)
            es = errors[order]
            gs = lb[order]
            gts = gs.sum()
            inter = gts - jnp.cumsum(gs)
            union = gts + jnp.cumsum(1.0 - gs)
            jac = 1.0 - inter / union
            jac = jnp.concatenate([jac[:1], jac[1:] - jac[:-1]])
            img_losses.append(jnp.dot(jnp.maximum(es, 0.0), jac))
        class_losses.append(jnp.mean(jnp.stack(img_losses)))
    return jnp.mean(jnp.stack(class_losses))


if __name__ == "__main__":
    key = jax.random.PRNGKey(0)
    k1, k2, k3, k4, k5, k6 = jax.random.split(key, 6)

    # Primary small shape from the module spec (single P-chunk, single row tile).
    B, C, H, W = 2, 4, 16, 16
    outputs = jax.random.normal(k1, (B, C, H, W), dtype=jnp.float32)
    targets = (jax.random.uniform(k2, (B, C, H, W)) < 0.5).astype(jnp.float32)
    loss = jax.block_until_ready(lovasz_loss(outputs, targets))
    ref = jax.block_until_ready(_lovasz_loss_ref(outputs, targets))
    assert jnp.allclose(loss, ref, rtol=1e-5, atol=1e-5), (loss, ref)

    # Larger spatial size: exercises the multi-chunk cumsum/jaccard carries.
    B2, C2, H2, W2 = 2, 4, 32, 32
    outputs2 = jax.random.normal(k3, (B2, C2, H2, W2), dtype=jnp.float32)
    targets2 = (jax.random.uniform(k4, (B2, C2, H2, W2)) < 0.5).astype(jnp.float32)
    loss2 = jax.block_until_ready(lovasz_loss(outputs2, targets2))
    ref2 = jax.block_until_ready(_lovasz_loss_ref(outputs2, targets2))
    assert jnp.allclose(loss2, ref2, rtol=1e-5, atol=1e-5), (loss2, ref2)

    # More (image, class) rows: exercises multiple row tiles / the megacore axis.
    B3, C3, H3, W3 = 2, 16, 32, 32
    outputs3 = jax.random.normal(k5, (B3, C3, H3, W3), dtype=jnp.float32)
    targets3 = (jax.random.uniform(k6, (B3, C3, H3, W3)) < 0.5).astype(jnp.float32)
    loss3 = jax.block_until_ready(lovasz_loss(outputs3, targets3))
    ref3 = jax.block_until_ready(_lovasz_loss_ref(outputs3, targets3))
    assert jnp.allclose(loss3, ref3, rtol=1e-5, atol=1e-5), (loss3, ref3)

    print("KERNEL_OK")
</pallas_src>

<mosaic_0001>
module attributes {stable_mosaic.version = 11 : i64} {
  func.func @_lovasz_kernel(%arg0: i32, %arg1: i32, %arg2: memref<8x256xf32, #tpu.memory_space<vmem>>, %arg3: memref<8x256xbf16, #tpu.memory_space<vmem>>, %arg4: memref<8x1xf32, #tpu.memory_space<vmem>>, %arg5: memref<1x256xf32, #tpu.memory_space<vmem>>, %arg6: memref<8x1xf32, #tpu.memory_space<vmem>>, %arg7: memref<128x128xbf16, #tpu.memory_space<vmem>>, %arg8: memref<8x1xf32, #tpu.memory_space<vmem>>, %arg9: memref<8x1xf32, #tpu.memory_space<vmem>>, %arg10: memref<8x1xf32, #tpu.memory_space<vmem>>) attributes {dimension_semantics = [#tpu.dimension_semantics<parallel>, #tpu.dimension_semantics<arbitrary>], iteration_bounds = array<i64: 1, 1>, scalar_prefetch = 0 : i64, scratch_operands = 4 : i64, tpu.core_type = #tpu.core_type<tc>, window_params = [{transform_indices = @transform_0, window_bounds = array<i64: 8, 256>}, {transform_indices = @transform_1, window_bounds = array<i64: 8, 256>}, {transform_indices = @transform_2, window_bounds = array<i64: 8, 1>}, {transform_indices = @transform_3, window_bounds = array<i64: 1, 256>}, {transform_indices = @transform_4, window_bounds = array<i64: 8, 1>}]} {
    %c0_i32 = arith.constant 0 : i32
    %0 = arith.cmpi eq, %arg1, %c0_i32 : i32
    %1 = arith.extui %0 : i1 to i32
    %c0_i32_0 = arith.constant 0 : i32
    %2 = arith.cmpi ne, %1, %c0_i32_0 : i32
    scf.if %2 {
      %cst_36 = arith.constant 0.000000e+00 : f32
      %71 = vector.broadcast %cst_36 : f32 to vector<8x1xf32>
      %c0_37 = arith.constant 0 : index
      %c0_38 = arith.constant 0 : index
      %72 = vector.load %arg8[%c0_37, %c0_38] : memref<8x1xf32, #tpu.memory_space<vmem>>, vector<8x1xf32>
      tpu.vector_store %arg8[%c0_37, %c0_38], %71 {strides = array<i32>} : memref<8x1xf32, #tpu.memory_space<vmem>>, vector<8x1xf32>,
      %cst_39 = arith.constant 0.000000e+00 : f32
      %73 = vector.broadcast %cst_39 : f32 to vector<8x1xf32>
      %c0_40 = arith.constant 0 : index
      %c0_41 = arith.constant 0 : index
      %74 = vector.load %arg9[%c0_40, %c0_41] : memref<8x1xf32, #tpu.memory_space<vmem>>, vector<8x1xf32>
      tpu.vector_store %arg9[%c0_40, %c0_41], %73 {strides = array<i32>} : memref<8x1xf32, #tpu.memory_space<vmem>>, vector<8x1xf32>,
      %cst_42 = arith.constant 0.000000e+00 : f32
      %75 = vector.broadcast %cst_42 : f32 to vector<8x1xf32>
      %c0_43 = arith.constant 0 : index
      %c0_44 = arith.constant 0 : index
      %76 = vector.load %arg10[%c0_43, %c0_44] : memref<8x1xf32, #tpu.memory_space<vmem>>, vector<8x1xf32>
      tpu.vector_store %arg10[%c0_43, %c0_44], %75 {strides = array<i32>} : memref<8x1xf32, #tpu.memory_space<vmem>>, vector<8x1xf32>,
      %77 = tpu.iota {dimensions = array<i32: 0>} : vector<128x128xi32>
      %78 = tpu.iota {dimensions = array<i32: 1>} : vector<128x128xi32>
      %79 = arith.cmpi sle, %77, %78 : vector<128x128xi32>
      %80 = arith.extui %79 : vector<128x128xi1> to vector<128x128xi32>
      %81 = arith.sitofp %80 : vector<128x128xi32> to vector<128x128xf32>
      %82 = arith.truncf %81 : vector<128x128xf32> to vector<128x128xbf16>
      %c0_45 = arith.constant 0 : index
      %c0_46 = arith.constant 0 : index
      %83 = vector.load %arg7[%c0_45, %c0_46] : memref<128x128xbf16, #tpu.memory_space<vmem>>, vector<128x128xbf16>
      tpu.vector_store %arg7[%c0_45, %c0_46], %82 {strides = array<i32>} : memref<128x128xbf16, #tpu.memory_space<vmem>>, vector<128x128xbf16>,
    } else {
    }
    %c0 = arith.constant 0 : index
    %c0_1 = arith.constant 0 : index
    %3 = vector.load %arg4[%c0, %c0_1] : memref<8x1xf32, #tpu.memory_space<vmem>>, vector<8x1xf32>
    %c0_2 = arith.constant 0 : index
    %c0_3 = arith.constant 0 : index
    %4 = vector.load %arg7[%c0_2, %c0_3] : memref<128x128xbf16, #tpu.memory_space<vmem>>, vector<128x128xbf16>
    %5 = tpu.iota {dimensions = array<i32: 1>} : vector<1x128xi32>
    %c0_i32_4 = arith.constant 0 : i32
    %6 = vector.broadcast %c0_i32_4 : i32 to vector<1x128xi32>
    %7 = arith.cmpi eq, %5, %6 : vector<1x128xi32>
    %c0_5 = arith.constant 0 : index
    %c0_6 = arith.constant 0 : index
    %8 = vector.load %arg8[%c0_5, %c0_6] : memref<8x1xf32, #tpu.memory_space<vmem>>, vector<8x1xf32>
    %c0_7 = arith.constant 0 : index
    %c0_8 = arith.constant 0 : index
    %9 = vector.load %arg9[%c0_7, %c0_8] : memref<8x1xf32, #tpu.memory_space<vmem>>, vector<8x1xf32>
    %c0_9 = arith.constant 0 : index
    %c0_10 = arith.constant 0 : index
    %10 = vector.load %arg10[%c0_9, %c0_10] : memref<8x1xf32, #tpu.memory_space<vmem>>, vector<8x1xf32>
    %c0_11 = arith.constant 0 : index
    %c0_12 = arith.constant 0 : index
    %11 = vector.load %arg3[%c0_11, %c0_12] : memref<8x256xbf16, #tpu.memory_space<vmem>>, vector<8x128xbf16>
    %c0_13 = arith.constant 0 : index
    %c0_14 = arith.constant 0 : index
    %12 = vector.load %arg2[%c0_13, %c0_14] : memref<8x256xf32, #tpu.memory_space<vmem>>, vector<8x128xf32>
    %c0_15 = arith.constant 0 : index
    %c0_16 = arith.constant 0 : index
    %13 = vector.load %arg5[%c0_15, %c0_16] : memref<1x256xf32, #tpu.memory_space<vmem>>, vector<1x128xf32>
    %cst = arith.constant dense<0.000000e+00> : vector<8x128xf32>
    %14 = tpu.matmul %11, %4, %cst {dimension_numbers = #tpu.dot_dimension_numbers<[1], [0], [0], [1], [0, 0, 1, 1], [], []>} : vector<8x128xbf16>, vector<128x128xbf16>, vector<8x128xf32> -> vector<8x128xf32>
    %15 = vector.broadcast %9 : vector<8x1xf32> to vector<8x128xf32>
    %16 = arith.addf %15, %14 : vector<8x128xf32>
    %17 = vector.broadcast %3 : vector<8x1xf32> to vector<8x128xf32>
    %18 = vector.broadcast %13 : vector<1x128xf32> to vector<8x128xf32>
    %19 = arith.addf %17, %18 : vector<8x128xf32>
    %20 = arith.subf %19, %16 : vector<8x128xf32>
    %21 = vector.broadcast %13 : vector<1x128xf32> to vector<8x128xf32>
    %22 = arith.divf %21, %20 : vector<8x128xf32>
    %c1_i32 = arith.constant 1 : i32
    %23 = tpu.dynamic_rotate %22 by %c1_i32 dim 1 : vector<8x128xf32>, i32 -> vector<8x128xf32>
    %24 = vector.shape_cast %7 : vector<1x128xi1> to vector<1x128xi1>
    %25 = vector.broadcast %24 : vector<1x128xi1> to vector<8x128xi1>
    %26 = vector.shape_cast %10 : vector<8x1xf32> to vector<8x1xf32>
    %27 = vector.broadcast %26 : vector<8x1xf32> to vector<8x128xf32>
    %28 = arith.select %25, %27, %23 : vector<8x128xi1>, vector<8x128xf32>
    %29 = arith.subf %22, %28 : vector<8x128xf32>
    %cst_17 = arith.constant 0.000000e+00 : f32
    %30 = vector.broadcast %cst_17 : f32 to vector<8x128xf32>
    %31 = arith.maximumf %12, %30 : vector<8x128xf32>
    %32 = arith.mulf %31, %29 : vector<8x128xf32>
    %cst_18 = arith.constant dense<0.000000e+00> : vector<8xf32>
    %33 = vector.multi_reduction <add>, %32, %cst_18 [1] : vector<8x128xf32> to vector<8xf32>
    %34 = vector.shape_cast %33 : vector<8xf32> to vector<8x1xf32>
    %35 = arith.addf %8, %34 : vector<8x1xf32>
    %36 = vector.extract_strided_slice %16 {offsets = [0, 127], sizes = [8, 1], strides = [1, 1]} : vector<8x128xf32> to vector<8x1xf32>
    %37 = vector.extract_strided_slice %22 {offsets = [0, 127], sizes = [8, 1], strides = [1, 1]} : vector<8x128xf32> to vector<8x1xf32>
    %c0_19 = arith.constant 0 : index
    %c128 = arith.constant 128 : index
    %38 = vector.load %arg3[%c0_19, %c128] : memref<8x256xbf16, #tpu.memory_space<vmem>>, vector<8x128xbf16>
    %c0_20 = arith.constant 0 : index
    %c128_21 = arith.constant 128 : index
    %39 = vector.load %arg2[%c0_20, %c128_21] : memref<8x256xf32, #tpu.memory_space<vmem>>, vector<8x128xf32>
    %c0_22 = arith.constant 0 : index
    %c128_23 = arith.constant 128 : index
    %40 = vector.load %arg5[%c0_22, %c128_23] : memref<1x256xf32, #tpu.memory_space<vmem>>, vector<1x128xf32>
    %cst_24 = arith.constant dense<0.000000e+00> : vector<8x128xf32>
    %41 = tpu.matmul %38, %4, %cst_24 {dimension_numbers = #tpu.dot_dimension_numbers<[1], [0], [0], [1], [0, 0, 1, 1], [], []>} : vector<8x128xbf16>, vector<128x128xbf16>, vector<8x128xf32> -> vector<8x128xf32>
    %42 = vector.broadcast %36 : vector<8x1xf32> to vector<8x128xf32>
    %43 = arith.addf %42, %41 : vector<8x128xf32>
    %44 = vector.broadcast %3 : vector<8x1xf32> to vector<8x128xf32>
    %45 = vector.broadcast %40 : vector<1x128xf32> to vector<8x128xf32>
    %46 = arith.addf %44, %45 : vector<8x128xf32>
    %47 = arith.subf %46, %43 : vector<8x128xf32>
    %48 = vector.broadcast %40 : vector<1x128xf32> to vector<8x128xf32>
    %49 = arith.divf %48, %47 : vector<8x128xf32>
    %c1_i32_25 = arith.constant 1 : i32
    %50 = tpu.dynamic_rotate %49 by %c1_i32_25 dim 1 : vector<8x128xf32>, i32 -> vector<8x128xf32>
    %51 = vector.shape_cast %7 : vector<1x128xi1> to vector<1x128xi1>
    %52 = vector.broadcast %51 : vector<1x128xi1> to vector<8x128xi1>
    %53 = vector.shape_cast %37 : vector<8x1xf32> to vector<8x1xf32>
    %54 = vector.broadcast %53 : vector<8x1xf32> to vector<8x128xf32>
    %55 = arith.select %52, %54, %50 : vector<8x128xi1>, vector<8x128xf32>
    %56 = arith.subf %49, %55 : vector<8x128xf32>
    %cst_26 = arith.constant 0.000000e+00 : f32
    %57 = vector.broadcast %cst_26 : f32 to vector<8x128xf32>
    %58 = arith.maximumf %39, %57 : vector<8x128xf32>
    %59 = arith.mulf %58, %56 : vector<8x128xf32>
    %cst_27 = arith.constant dense<0.000000e+00> : vector<8xf32>
    %60 = vector.multi_reduction <add>, %59, %cst_27 [1] : vector<8x128xf32> to vector<8xf32>
    %61 = vector.shape_cast %60 : vector<8xf32> to vector<8x1xf32>
    %62 = arith.addf %35, %61 : vector<8x1xf32>
    %63 = vector.extract_strided_slice %43 {offsets = [0, 127], sizes = [8, 1], strides = [1, 1]} : vector<8x128xf32> to vector<8x1xf32>
    %64 = vector.extract_strided_slice %49 {offsets = [0, 127], sizes = [8, 1], strides = [1, 1]} : vector<8x128xf32> to vector<8x1xf32>
    %c0_28 = arith.constant 0 : index
    %c0_29 = arith.constant 0 : index
    %65 = vector.load %arg8[%c0_28, %c0_29] : memref<8x1xf32, #tpu.memory_space<vmem>>, vector<8x1xf32>
    tpu.vector_store %arg8[%c0_28, %c0_29], %62 {strides = array<i32>} : memref<8x1xf32, #tpu.memory_space<vmem>>, vector<8x1xf32>,
    %c0_30 = arith.constant 0 : index
    %c0_31 = arith.constant 0 : index
    %66 = vector.load %arg9[%c0_30, %c0_31] : memref<8x1xf32, #tpu.memory_space<vmem>>, vector<8x1xf32>
    tpu.vector_store %arg9[%c0_30, %c0_31], %63 {strides = array<i32>} : memref<8x1xf32, #tpu.memory_space<vmem>>, vector<8x1xf32>,
    %c0_32 = arith.constant 0 : index
    %c0_33 = arith.constant 0 : index
    %67 = vector.load %arg10[%c0_32, %c0_33] : memref<8x1xf32, #tpu.memory_space<vmem>>, vector<8x1xf32>
    tpu.vector_store %arg10[%c0_32, %c0_33], %64 {strides = array<i32>} : memref<8x1xf32, #tpu.memory_space<vmem>>, vector<8x1xf32>,
    %c0_i32_34 = arith.constant 0 : i32
    %68 = arith.cmpi eq, %arg1, %c0_i32_34 : i32
    %69 = arith.extui %68 : i1 to i32
    %c0_i32_35 = arith.constant 0 : i32
    %70 = arith.cmpi ne, %69, %c0_i32_35 : i32
    scf.if %70 {
      %c0_36 = arith.constant 0 : index
      %c0_37 = arith.constant 0 : index
      %71 = vector.load %arg6[%c0_36, %c0_37] : memref<8x1xf32, #tpu.memory_space<vmem>>, vector<8x1xf32>
      tpu.vector_store %arg6[%c0_36, %c0_37], %62 {strides = array<i32>} : memref<8x1xf32, #tpu.memory_space<vmem>>, vector<8x1xf32>,
    } else {
    }
    return
  }
  func.func @transform_0(%arg0: i32, %arg1: i32) -> (i32, i32) {
    %c0_i32 = arith.constant 0 : i32
    return %arg0, %arg1 : i32, i32
  }
  func.func @transform_1(%arg0: i32, %arg1: i32) -> (i32, i32) {
    %c0_i32 = arith.constant 0 : i32
    return %arg0, %arg1 : i32, i32
  }
  func.func @transform_2(%arg0: i32, %arg1: i32) -> (i32, i32) {
    %c0_i32 = arith.constant 0 : i32
    %c0_i32_0 = arith.constant 0 : i32
    return %arg0, %c0_i32 : i32, i32
  }
  func.func @transform_3(%arg0: i32, %arg1: i32) -> (i32, i32) {
    %c0_i32 = arith.constant 0 : i32
    %c0_i32_0 = arith.constant 0 : i32
    return %c0_i32, %arg1 : i32, i32
  }
  func.func @transform_4(%arg0: i32, %arg1: i32) -> (i32, i32) {
    %c0_i32 = arith.constant 0 : i32
    %c0_i32_0 = arith.constant 0 : i32
    return %arg0, %c0_i32 : i32, i32
  }
}

</mosaic_0001>

<llo_original>
// kernel: tpu_custom_call.1
$region0: #{tpu_custom_call.1}
  #allocation0 [shape = 'u32[]', space=smem, size = 0x4, offset = 0x4, fixed_abs, tag = 'smem constant byte address 0x4 - core index']
  #allocation1 [shape = 'u32[72,128]{1,0:T(1,128)}', space=vmem, size = 0x9000, scoped, tag = 'internal scratch']
  #allocation2 [shape = 'bf16[128,128]{1,0:T(8,128)(2,1)}', space=vmem, size = 0x8000, scoped, tag = 'scratch operand']
  #allocation3 [shape = 'f32[8,1]{1,0:T(8,128)}', space=vmem, size = 0x1000, scoped, tag = 'scratch operand']
  #allocation4 [shape = 'f32[8,1]{1,0:T(8,128)}', space=vmem, size = 0x1000, scoped, tag = 'scratch operand']
  #allocation5 [shape = 'f32[8,1]{1,0:T(8,128)}', space=vmem, size = 0x1000, scoped, tag = 'scratch operand']
  %s0 = inlined_call_operand.hbm [shape: f32[8,256], index: 0, kind: input, shape index: {}]
  %s1 = inlined_call_operand.vmem [shape: bf16[8,256], index: 1, kind: input, shape index: {}]
  %s2 = inlined_call_operand.vmem [shape: f32[8,1], index: 2, kind: input, shape index: {}]
  %s3 = inlined_call_operand.hbm [shape: f32[1,256], index: 3, kind: input, shape index: {}]
  %s4 = inlined_call_operand.vmem [shape: f32[8,1], index: 4, kind: output, shape index: {}]
  %s5 = sld [smem:[#allocation0]]
  $region42: #{tpu_custom_call.1} parent=0
    _
  %s7 = ssub.s32 1, %s5
  %s8 = scalar_select 0, %s7, %s5
  $region1: #{tpu_custom_call.1} parent=0
    #allocation6 [shape = 'u8[8192]{0}', space=vmem, size = 0x2000, scoped, tag = 'input window, operand 0, single buffered']
    #allocation7 [shape = 's32[1]{0}', space=sflag, size = 0x4, scoped, tag = 'scoped memory for tpu_custom_call.1']
    #allocation8 [shape = 'u8[1024]{0}', space=vmem, size = 0x400, scoped, tag = 'input window, operand 3, single buffered']
    #allocation9 [shape = 's32[1]{0}', space=sflag, size = 0x4, scoped, tag = 'scoped memory for tpu_custom_call.1']
    %9 = vsyncpa [#allocation7], 0
    %10 = vsyncpa [#allocation9], 0
    // Predicated region
    $region2: #{tpu_custom_call.1} parent=1 // pred_check
      _
    $region3: #{tpu_custom_call.1} parent=1 // pred_check_branch
      %12 = sbr.rel (0) target = $region5
    $region4: #{tpu_custom_call.1} parent=1 // pred_region
      %14 = vsyncadd [#allocation7], 0
      %s16 = sshll.u32 %s0, 4
      %s17 = int_to_ptr.hbm [resolvable:$true] %s16
      %s18 = sshll.u32 [#allocation6], 4
      %s19 = int_to_ptr.vmem [resolvable:$true] %s18
      %21 = dma.hbm_to_vmem [thread:$0]  %s17, 256, %s19, [#allocation7]
    $region5: #{tpu_custom_call.1} parent=1 // pred_fallthru
      _
    // Predicated region
    $region6: #{tpu_custom_call.1} parent=1 // pred_check
      _
    $region7: #{tpu_custom_call.1} parent=1 // pred_check_branch
      %23 = sbr.rel (0) target = $region9
    $region8: #{tpu_custom_call.1} parent=1 // pred_region
      _
    $region9: #{tpu_custom_call.1} parent=1 // pred_fallthru
      _
    // Predicated region
    $region10: #{tpu_custom_call.1} parent=1 // pred_check
      _
    $region11: #{tpu_custom_call.1} parent=1 // pred_check_branch
      %25 = sbr.rel (0) target = $region13
    $region12: #{tpu_custom_call.1} parent=1 // pred_region
      _
    $region13: #{tpu_custom_call.1} parent=1 // pred_fallthru
      _
    // Predicated region
    $region14: #{tpu_custom_call.1} parent=1 // pred_check
      _
    $region15: #{tpu_custom_call.1} parent=1 // pred_check_branch
      %27 = sbr.rel (0) target = $region17
    $region16: #{tpu_custom_call.1} parent=1 // pred_region
      %29 = vsyncadd [#allocation9], 0
      %s31 = sshll.u32 %s3, 4
      %s32 = int_to_ptr.hbm [resolvable:$true] %s31
      %s33 = sshll.u32 [#allocation8], 4
      %s34 = int_to_ptr.vmem [resolvable:$true] %s33
      %36 = dma.hbm_to_vmem [thread:$0]  %s32, 32, %s34, [#allocation9]
    $region17: #{tpu_custom_call.1} parent=1 // pred_fallthru
      _
    // Predicated region
    $region18: #{tpu_custom_call.1} parent=1 // pred_check
      _
    $region19: #{tpu_custom_call.1} parent=1 // pred_check_branch
      %38 = sbr.rel (0) target = $region21
    $region20: #{tpu_custom_call.1} parent=1 // pred_region
      %40 = dma.done [#allocation7], 256
    $region21: #{tpu_custom_call.1} parent=1 // pred_fallthru
      _
    // Predicated region
    $region22: #{tpu_custom_call.1} parent=1 // pred_check
      _
    $region23: #{tpu_custom_call.1} parent=1 // pred_check_branch
      %42 = sbr.rel (0) target = $region25
    $region24: #{tpu_custom_call.1} parent=1 // pred_region
      %44 = dma.done [#allocation9], 32
    $region25: #{tpu_custom_call.1} parent=1 // pred_fallthru
      _
    %p45 = scmp.eq.s32.totalorder 0, 0
    // Predicated region
    $region26: #{tpu_custom_call.1} parent=1 // pred_check
      %p46 = pneg %p45
    $region27: #{tpu_custom_call.1} parent=1 // pred_check_branch
      %48 = sbr.rel (%p46) target = $region29
    $region28: #{tpu_custom_call.1} parent=1 // pred_region
      %vm49 = vcmask 7168
      %50 = vst.msk [vmem:[#allocation3] sm:$0xff] %vm49, 0.0
      %51 = vst.msk [vmem:[#allocation4] sm:$0xff] %vm49, 0.0
      %52 = vst.msk [vmem:[#allocation5] sm:$0xff] %vm49, 0.0
      %v53 = vlaneseq
      %v54 = vshrl.u32 %v53, 7
      %v55 = vadd.s32 %v54, 8
      %v56 = vadd.s32 %v54, 16
      %v57 = vadd.s32 %v54, 24
      %v58 = vadd.s32 %v54, 32
      %v59 = vadd.s32 %v54, 40
      %v60 = vadd.s32 %v54, 48
      %v61 = vadd.s32 %v54, 56
      %v62 = vadd.s32 %v54, 64
      %v63 = vadd.s32 %v54, 72
      %v64 = vadd.s32 %v54, 80
      %v65 = vadd.s32 %v54, 88
      %v66 = vadd.s32 %v54, 96
      %v67 = vadd.s32 %v54, 104
      %v68 = vadd.s32 %v54, 112
      %v69 = vadd.s32 %v54, 120
      %v70 = vlaneseq
      %v71 = vand.u32 %v70, 127
      %vm72 = vcmp.le.s32.totalorder %v54, %v71
      %vm73 = vcmp.le.s32.totalorder %v55, %v71
      %vm74 = vcmp.le.s32.totalorder %v56, %v71
      %vm75 = vcmp.le.s32.totalorder %v57, %v71
      %vm76 = vcmp.le.s32.totalorder %v58, %v71
      %vm77 = vcmp.le.s32.totalorder %v59, %v71
      %vm78 = vcmp.le.s32.totalorder %v60, %v71
      %vm79 = vcmp.le.s32.totalorder %v61, %v71
      %vm80 = vcmp.le.s32.totalorder %v62, %v71
      %vm81 = vcmp.le.s32.totalorder %v63, %v71
      %vm82 = vcmp.le.s32.totalorder %v64, %v71
      %vm83 = vcmp.le.s32.totalorder %v65, %v71
      %vm84 = vcmp.le.s32.totalorder %v66, %v71
      %vm85 = vcmp.le.s32.totalorder %v67, %v71
      %vm86 = vcmp.le.s32.totalorder %v68, %v71
      %vm87 = vcmp.le.s32.totalorder %v69, %v71
      %v88 = vsel %vm72, 1, 0
      %v89 = vsel %vm73, 1, 0
      %v90 = vsel %vm74, 1, 0
      %v91 = vsel %vm75, 1, 0
      %v92 = vsel %vm76, 1, 0
      %v93 = vsel %vm77, 1, 0
      %v94 = vsel %vm78, 1, 0
      %v95 = vsel %vm79, 1, 0
      %v96 = vsel %vm80, 1, 0
      %v97 = vsel %vm81, 1, 0
      %v98 = vsel %vm82, 1, 0
      %v99 = vsel %vm83, 1, 0
      %v100 = vsel %vm84, 1, 0
      %v101 = vsel %vm85, 1, 0
      %v102 = vsel %vm86, 1, 0
      %v103 = vsel %vm87, 1, 0
      %v104 = vcvt.s32.f32 %v88
      %v105 = vcvt.s32.f32 %v89
      %v106 = vcvt.s32.f32 %v90
      %v107 = vcvt.s32.f32 %v91
      %v108 = vcvt.s32.f32 %v92
      %v109 = vcvt.s32.f32 %v93
      %v110 = vcvt.s32.f32 %v94
      %v111 = vcvt.s32.f32 %v95
      %v112 = vcvt.s32.f32 %v96
      %v113 = vcvt.s32.f32 %v97
      %v114 = vcvt.s32.f32 %v98
      %v115 = vcvt.s32.f32 %v99
      %v116 = vcvt.s32.f32 %v100
      %v117 = vcvt.s32.f32 %v101
      %v118 = vcvt.s32.f32 %v102
      %v119 = vcvt.s32.f32 %v103
      %v120 = vpack.c.bf16 %v104, %v104
      %v121 = vpack.c.bf16 %v105, %v105
      %v122 = vpack.c.bf16 %v106, %v106
      %v123 = vpack.c.bf16 %v107, %v107
      %v124 = vpack.c.bf16 %v108, %v108
      %v125 = vpack.c.bf16 %v109, %v109
      %v126 = vpack.c.bf16 %v110, %v110
      %v127 = vpack.c.bf16 %v111, %v111
      %v128 = vpack.c.bf16 %v112, %v112
      %v129 = vpack.c.bf16 %v113, %v113
      %v130 = vpack.c.bf16 %v114, %v114
      %v131 = vpack.c.bf16 %v115, %v115
      %v132 = vpack.c.bf16 %v116, %v116
      %v133 = vpack.c.bf16 %v117, %v117
      %v134 = vpack.c.bf16 %v118, %v118
      %v135 = vpack.c.bf16 %v119, %v119
      %136 = vst [vmem:[#allocation2] sm:$0xf] %v120
      %137 = vst [vmem:[#allocation2 + $0x4] sm:$0xf] %v121
      %138 = vst [vmem:[#allocation2 + $0x8] sm:$0xf] %v122
      %139 = vst [vmem:[#allocation2 + $0xc] sm:$0xf] %v123
      %140 = vst [vmem:[#allocation2 + $0x10] sm:$0xf] %v124
      %141 = vst [vmem:[#allocation2 + $0x14] sm:$0xf] %v125
      %142 = vst [vmem:[#allocation2 + $0x18] sm:$0xf] %v126
      %143 = vst [vmem:[#allocation2 + $0x1c] sm:$0xf] %v127
      %144 = vst [vmem:[#allocation2 + $0x20] sm:$0xf] %v128
      %145 = vst [vmem:[#allocation2 + $0x24] sm:$0xf] %v129
      %146 = vst [vmem:[#allocation2 + $0x28] sm:$0xf] %v130
      %147 = vst [vmem:[#allocation2 + $0x2c] sm:$0xf] %v131
      %148 = vst [vmem:[#allocation2 + $0x30] sm:$0xf] %v132
      %149 = vst [vmem:[#allocation2 + $0x34] sm:$0xf] %v133
      %150 = vst [vmem:[#allocation2 + $0x38] sm:$0xf] %v134
      %151 = vst [vmem:[#allocation2 + $0x3c] sm:$0xf] %v135
    $region29: #{tpu_custom_call.1} parent=1 // pred_fallthru
      _
    %v152 = vld [vmem:[%s2] sm:$0xff]
    %v153 = vld [vmem:[#allocation2] sm:$0xf]
    %v154 = vld [vmem:[#allocation2 + $0x4] sm:$0xf]
    %v155 = vld [vmem:[#allocation2 + $0x8] sm:$0xf]
    %v156 = vld [vmem:[#allocation2 + $0xc] sm:$0xf]
    %v157 = vld [vmem:[#allocation2 + $0x10] sm:$0xf]
    %v158 = vld [vmem:[#allocation2 + $0x14] sm:$0xf]
    %v159 = vld [vmem:[#allocation2 + $0x18] sm:$0xf]
    %v160 = vld [vmem:[#allocation2 + $0x1c] sm:$0xf]
    %v161 = vld [vmem:[#allocation2 + $0x20] sm:$0xf]
    %v162 = vld [vmem:[#allocation2 + $0x24] sm:$0xf]
    %v163 = vld [vmem:[#allocation2 + $0x28] sm:$0xf]
    %v164 = vld [vmem:[#allocation2 + $0x2c] sm:$0xf]
    %v165 = vld [vmem:[#allocation2 + $0x30] sm:$0xf]
    %v166 = vld [vmem:[#allocation2 + $0x34] sm:$0xf]
    %v167 = vld [vmem:[#allocation2 + $0x38] sm:$0xf]
    %v168 = vld [vmem:[#allocation2 + $0x3c] sm:$0xf]
    %v169 = vlaneseq
    %v170 = vand.u32 %v169, 127
    %vm171 = vcmp.eq.s32.totalorder %v170, 0
    %v172 = vld [vmem:[#allocation3] sm:$0xff]
    %v173 = vld [vmem:[#allocation4] sm:$0xff]
    %v174 = vld [vmem:[#allocation5] sm:$0xff]
    %v175 = vld [vmem:[%s1] sm:$0xf]
    %v176 = vld [vmem:[#allocation6] sm:$0xff]
    %v177 = vld [vmem:[#allocation8] sm:$0x1]
    %v194 = vunpack.c.l.b16 %v153
    %v195 = vunpack.c.l.b16 %v154
    %v196 = vunpack.c.l.b16 %v155
    %v197 = vunpack.c.l.b16 %v156
    %v198 = vunpack.c.l.b16 %v157
    %v199 = vunpack.c.l.b16 %v158
    %v200 = vunpack.c.l.b16 %v159
    %v201 = vunpack.c.l.b16 %v160
    %v202 = vunpack.c.l.b16 %v161
    %v203 = vunpack.c.l.b16 %v162
    %v204 = vunpack.c.l.b16 %v163
    %v205 = vunpack.c.l.b16 %v164
    %v206 = vunpack.c.l.b16 %v165
    %v207 = vunpack.c.l.b16 %v166
    %v208 = vunpack.c.l.b16 %v167
    %v209 = vunpack.c.l.b16 %v168
    %v210 = vpack.c.b16 %v195, %v194
    %v211 = vpack.c.b16 %v197, %v196
    %v212 = vpack.c.b16 %v199, %v198
    %v213 = vpack.c.b16 %v201, %v200
    %v214 = vpack.c.b16 %v203, %v202
    %v215 = vpack.c.b16 %v205, %v204
    %v216 = vpack.c.b16 %v207, %v206
    %v217 = vpack.c.b16 %v209, %v208
    %226 = vmatpush.bf16.msra.mxu0 %v217
    %227 = vmatpush.bf16.msra.mxu0 %v216
    %228 = vmatpush.bf16.msra.mxu0 %v215
    %229 = vmatpush.bf16.msra.mxu0 %v214
    %230 = vmatpush.bf16.msra.mxu0 %v213
    %231 = vmatpush.bf16.msra.mxu0 %v212
    %232 = vmatpush.bf16.msra.mxu0 %v211
    %233 = vmatpush.bf16.msra.mxu0 %v210
    %234 = vmatmul.bf16.gmra.mxu0 %v175
    %v235 = vpop.f32.mrf.mxu0
    %v236 = vadd.f32 0.0, %v235
    %v237 = vpop.f32.mrf.mxu0
    %238 = vdwg.mxu0
    %240 = vset.pattern.permute.xlu0 0
    %241 = vperm.xlu0 %240, %v173
    %v242 = vpop.permute.xlu0 %241
    %v244 = vadd.f32 %v242, %v236
    %246 = vset.pattern.permute.xlu0 0
    %247 = vperm.xlu0 %246, %v152
    %v248 = vpop.permute.xlu0 %247
    %v251 = vperm.slane %v177, 0
    %v253 = vadd.f32 %v248, %v251
    %v254 = vsub.f32 %v253, %v244
    %v255 = vrcp.pop %v254
    %v256 = vmul.f32 %v254, %v255
    %v257 = vsub.f32 1.0, %v256
    %v258 = vmul.f32 %v255, %v257
    %v259 = vadd.f32 %v255, %v258
    %vm260 = vweird.f32 %v254
    %vm261 = vweird.f32 %v255
    %vm262 = vmor %vm260, %vm261
    %v263 = vsel %vm262, %v255, %v259
    %v264 = vand.u32 2147483647, %v254
    %vm265 = vcmp.eq.f32.partialorder %v264, 8.507059e+37
    %v266 = vand.u32 %v254, 2147483648
    %v267 = vor.u32 1.1754944e-38, %v266
    %v268 = vsel %vm265, %v267, %v263
    %v269 = vmul.f32 %v251, %v268
    %270 = vrot.lane.b32.xlu0 %v269, 1
    %v271 = vpop.permute.xlu0 %270
    %v272 = vsel %vm171, 1, 0
    %vm273 = vcmp.eq.s32.totalorder %v272, 1
    %275 = vset.pattern.permute.xlu0 0
    %276 = vperm.xlu0 %275, %v174
    %v277 = vpop.permute.xlu0 %276
    %v279 = vsel %vm273, %v277, %v271
    %v280 = vsub.f32 %v269, %v279
    %v281 = vmax.f32 %v176, 0.0
    %v282 = vmul.f32 %v281, %v280
    %283 = vadd.xlane.f32.xlu0 %v282
    %v284 = vpop.xlane.xlu0 %283
    %v285 = vadd.f32 %v172, %v284
    %v286 = vld [vmem:[%s1 + $0x4] sm:$0xf]
    %v287 = vld [vmem:[#allocation6 + $0x8] sm:$0xff]
    %v288 = vld [vmem:[#allocation8 + $0x1] sm:$0x1]
    %289 = vmatpush.bf16.msra.mxu0 %v217
    %290 = vmatpush.bf16.msra.mxu0 %v216
    %291 = vmatpush.bf16.msra.mxu0 %v215
    %292 = vmatpush.bf16.msra.mxu0 %v214
    %293 = vmatpush.bf16.msra.mxu0 %v213
    %294 = vmatpush.bf16.msra.mxu0 %v212
    %295 = vmatpush.bf16.msra.mxu0 %v211
    %296 = vmatpush.bf16.msra.mxu0 %v210
    %297 = vmatmul.bf16.gmra.mxu0 %v286
    %v298 = vpop.f32.mrf.mxu0
    %v299 = vadd.f32 0.0, %v298
    %v300 = vpop.f32.mrf.mxu0
    %301 = vdwg.mxu0
    %303 = vset.pattern.permute.xlu0 127
    %304 = vperm.xlu0 %303, %v244
    %v305 = vpop.permute.xlu0 %304
    %v307 = vadd.f32 %v305, %v299
    %v309 = vperm.slane %v288, 0
    %v311 = vadd.f32 %v248, %v309
    %v312 = vsub.f32 %v311, %v307
    %v313 = vrcp.pop %v312
    %v314 = vmul.f32 %v312, %v313
    %v315 = vsub.f32 1.0, %v314
    %v316 = vmul.f32 %v313, %v315
    %v317 = vadd.f32 %v313, %v316
    %vm318 = vweird.f32 %v312
    %vm319 = vweird.f32 %v313
    %vm320 = vmor %vm318, %vm319
    %v321 = vsel %vm320, %v313, %v317
    %v322 = vand.u32 2147483647, %v312
    %vm323 = vcmp.eq.f32.partialorder %v322, 8.507059e+37
    %v324 = vand.u32 %v312, 2147483648
    %v325 = vor.u32 1.1754944e-38, %v324
    %v326 = vsel %vm323, %v325, %v321
    %v327 = vmul.f32 %v309, %v326
    %328 = vrot.lane.b32.xlu0 %v327, 1
    %v329 = vpop.permute.xlu0 %328
    %331 = vset.pattern.permute.xlu0 127
    %332 = vperm.xlu0 %331, %v269
    %v333 = vpop.permute.xlu0 %332
    %v335 = vsel %vm273, %v333, %v329
    %v336 = vsub.f32 %v327, %v335
    %v337 = vmax.f32 %v287, 0.0
    %v338 = vmul.f32 %v337, %v336
    %339 = vadd.xlane.f32.xlu0 %v338
    %v340 = vpop.xlane.xlu0 %339
    %v341 = vadd.f32 %v285, %v340
    %vm342 = vcmask 7168
    %343 = vst.msk [vmem:[#allocation3] sm:$0xff] %vm342, %v341
    %345 = vrot.lane.b32.xlu0 %v307, 1
    %v346 = vpop.permute.xlu0 %345
    %348 = vst.msk [vmem:[#allocation4] sm:$0xff] %vm342, %v346
    %350 = vrot.lane.b32.xlu0 %v327, 1
    %v351 = vpop.permute.xlu0 %350
    %353 = vst.msk [vmem:[#allocation5] sm:$0xff] %vm342, %v351
    // Predicated region
    $region30: #{tpu_custom_call.1} parent=1 // pred_check
      %p354 = pneg %p45
    $region31: #{tpu_custom_call.1} parent=1 // pred_check_branch
      %356 = sbr.rel (%p354) target = $region33
    $region32: #{tpu_custom_call.1} parent=1 // pred_region
      %357 = vst.msk [vmem:[%s4] sm:$0xff] %vm342, %v341
    $region33: #{tpu_custom_call.1} parent=1 // pred_fallthru
      _
    // Predicated region
    $region34: #{tpu_custom_call.1} parent=1 // pred_check
      _
    $region35: #{tpu_custom_call.1} parent=1 // pred_check_branch
      %359 = sbr.rel (0) target = $region37
    $region36: #{tpu_custom_call.1} parent=1 // pred_region
      _
    $region37: #{tpu_custom_call.1} parent=1 // pred_fallthru
      _
    // Predicated region
    $region38: #{tpu_custom_call.1} parent=1 // pred_check
      _
    $region39: #{tpu_custom_call.1} parent=1 // pred_check_branch
      %361 = sbr.rel (0) target = $region41
    $region40: #{tpu_custom_call.1} parent=1 // pred_region
      _
    $region41: #{tpu_custom_call.1} parent=1 // pred_fallthru
      _
    %362 = vsyncpa [#allocation7], 1
    %363 = vsyncpa [#allocation9], 1

</llo_original>
